<compile_context>
chip_gen: v5e
topology: v5e:2x2
jax: 0.10.0
libtpu: 0.0.40
codegen_flags: <defaults>
</compile_context>

<pallas_src>
import jax
import jax.numpy as jnp
from jax.experimental import pallas as pl
from jax.experimental.pallas import tpu as pltpu


def _round_up(x, m):
    return (x + m - 1) // m * m


def _embeddings_kernel(word_ids_ref, char_ids_ref, wtab_ref, ctab_ref, w_ref, b_ref,
                       out_ref):
    # word_ids_ref : (bn, 1)   int32   word ids for this block of rows
    # char_ids_ref : (bn, T)   int32   char ids for this block of rows
    # wtab_ref     : (Vw, Dw)  f32     word embedding table (resident)
    # ctab_ref     : (Vc, CF)  f32     char table pre-repeated along F (col o -> channel o//F)
    # w_ref        : (K, CF)   f32     w_ref[k, o] == conv.weight[o, 0, k]
    # b_ref        : (1, CF)   f32     conv bias
    # out_ref      : (bn, Dw+CF) f32   concat(word_emb, char_cnn_max)
    bn = word_ids_ref.shape[0]
    Vw, Dw = wtab_ref.shape
    Vc, CF = ctab_ref.shape
    K = w_ref.shape[0]
    T = char_ids_ref.shape[1]

    # ---- word embedding gather: one-hot x table on the MXU ----
    wid = word_ids_ref[...]                                       # (bn, 1) i32
    iota_w = jax.lax.broadcasted_iota(jnp.int32, (bn, Vw), 1)
    oh_w = (wid == iota_w).astype(jnp.float32)                    # (bn, Vw)
    out_ref[:, :Dw] = jnp.dot(oh_w, wtab_ref[...],
                              preferred_element_type=jnp.float32)  # (bn, Dw)

    # ---- char gather + depthwise conv (lane-vectorized over C*F) + max over time ----
    cids = char_ids_ref[...]                                       # (bn, T) i32
    ctab = ctab_ref[...]                                           # (Vc, CF)
    w = w_ref[...]                                                 # (K, CF)
    iota_c = jax.lax.broadcasted_iota(jnp.int32, (bn, Vc), 1)

    window = []   # rolling window of the last K per-time char embeddings (bn, CF)
    m = None
    for t in range(T):                                             # T, K tiny -> unrolled
        oh = (cids[:, t:t + 1] == iota_c).astype(jnp.float32)      # (bn, Vc)
        # gather + repeat-over-F fused into one matmul (column o reads channel o//F)
        rep = jnp.dot(oh, ctab, preferred_element_type=jnp.float32)  # (bn, CF)
        window.append(rep)
        if len(window) > K:
            window.pop(0)
        if t >= K - 1:
            # conv output at position p = t - K + 1, all C*F channels at once
            acc = window[0] * w[0:1, :]
            for k in range(1, K):
                acc = acc + window[k] * w[k:k + 1, :]
            m = acc if m is None else jnp.maximum(m, acc)
    out_ref[:, Dw:] = m + b_ref[...]                               # (bn, CF)


def embeddings_forward(words, chars, word_table, char_table, cnn_w, cnn_b, *, bn=512):
    """words: (S, B) int32, chars: (B, S, T) int32. Returns (S, B, Dw + C*F) f32."""
    S, B = words.shape
    _, _, T = chars.shape
    Vw, Dw = word_table.shape
    Vc, C = char_table.shape
    CF, K = cnn_w.shape
    F = CF // C
    assert CF == C * F and T >= K
    Dout = Dw + CF

    N = S * B
    # effective row block: multiple of 8, no larger than the (padded) row count
    bn_eff = max(8, _round_up(min(bn, _round_up(N, 8)), 8))
    N_pad = _round_up(N, bn_eff)
    grid = N_pad // bn_eff

    # --- glue: id layout only (ids are 16x smaller than the embeddings) ---
    word_ids = words.reshape(N, 1).astype(jnp.int32)
    char_ids = jnp.transpose(chars, (1, 0, 2)).reshape(N, T).astype(jnp.int32)
    if N_pad != N:
        word_ids = jnp.pad(word_ids, ((0, N_pad - N), (0, 0)))
        char_ids = jnp.pad(char_ids, ((0, N_pad - N), (0, 0)))

    # --- parameter relayout (tiny, done once outside the kernel) ---
    wtab = word_table.astype(jnp.float32)                            # (Vw, Dw)
    # column o = c*F + f reads char channel c = o // F  -> c-major repeat
    ctab_rep = jnp.repeat(char_table.astype(jnp.float32), F, axis=1)  # (Vc, CF)
    w_vec = jnp.transpose(cnn_w.astype(jnp.float32))                 # (K, CF)
    b_vec = cnn_b.astype(jnp.float32).reshape(1, CF)                 # (1, CF)

    out = pl.pallas_call(
        _embeddings_kernel,
        out_shape=jax.ShapeDtypeStruct((N_pad, Dout), jnp.float32),
        grid_spec=pltpu.PrefetchScalarGridSpec(
            num_scalar_prefetch=0,
            grid=(grid,),
            in_specs=[
                pl.BlockSpec((bn_eff, 1), lambda i: (i, 0)),      # word ids
                pl.BlockSpec((bn_eff, T), lambda i: (i, 0)),      # char ids
                pl.BlockSpec((Vw, Dw), lambda i: (0, 0)),         # word table (resident)
                pl.BlockSpec((Vc, CF), lambda i: (0, 0)),         # repeated char table
                pl.BlockSpec((K, CF), lambda i: (0, 0)),          # conv weights
                pl.BlockSpec((1, CF), lambda i: (0, 0)),          # conv bias
            ],
            out_specs=pl.BlockSpec((bn_eff, Dout), lambda i: (i, 0)),
        ),
        compiler_params=pltpu.CompilerParams(dimension_semantics=("parallel",)),
    )(word_ids, char_ids, wtab, ctab_rep, w_vec, b_vec)

    return out[:N].reshape(S, B, Dout)


def _reference(words, chars, word_table, char_table, cnn_w, cnn_b):
    """Pure-JAX transliteration of the PyTorch forward (eval mode) for checking."""
    S, B = words.shape
    Bc, Sc, T = chars.shape
    Dw = word_table.shape[1]
    C = char_table.shape[1]
    CF, K = cnn_w.shape
    F = CF // C
    T_out = T - K + 1

    word_emb = jnp.take(word_table, words, axis=0)               # (S, B, Dw)
    char_emb = jnp.take(char_table, chars, axis=0)               # (B, S, T, C)
    x = jnp.transpose(char_emb, (0, 1, 3, 2))                    # (B, S, C, T)

    conv = jnp.zeros((Bc, Sc, CF, T_out), jnp.float32)
    for o in range(CF):
        c = o // F
        acc = jnp.zeros((Bc, Sc, T_out), jnp.float32)
        for k in range(K):
            acc = acc + x[:, :, c, k:k + T_out] * cnn_w[o, k]
        conv = conv.at[:, :, o, :].set(acc + cnn_b[o])
    mx = jnp.max(conv, axis=-1)                                  # (B, S, CF)
    mx = jnp.transpose(mx, (1, 0, 2))                            # (S, B, CF)
    return jnp.concatenate([word_emb, mx], axis=2)


if __name__ == "__main__":
    # small synthetic config matching the module
    word_input_dim, word_emb_dim = 50, 32
    char_input_dim, char_emb_dim = 30, 16
    char_cnn_filter_num, char_cnn_kernel_size = 4, 3
    word_pad_idx, char_pad_idx = 0, 0

    key = jax.random.PRNGKey(0)
    k1, k2, k3, k4 = jax.random.split(key, 4)

    # deterministic parameters (padding rows zeroed, as in the module __init__)
    word_table = jax.random.normal(k1, (word_input_dim, word_emb_dim), jnp.float32)
    word_table = word_table.at[word_pad_idx].set(0.0)
    char_table = jax.random.normal(k2, (char_input_dim, char_emb_dim), jnp.float32)
    char_table = char_table.at[char_pad_idx].set(0.0)
    out_channels = char_emb_dim * char_cnn_filter_num
    cnn_w = 0.1 * jax.random.normal(k3, (out_channels, char_cnn_kernel_size), jnp.float32)
    cnn_b = 0.1 * jax.random.normal(k4, (out_channels,), jnp.float32)

    # test 1: tiny shape (single grid step)
    sent_len, batch, word_len = 8, 2, 12
    ka, kb = jax.random.split(jax.random.PRNGKey(1), 2)
    words = jax.random.randint(ka, (sent_len, batch), 0, word_input_dim, jnp.int32)
    chars = jax.random.randint(kb, (batch, sent_len, word_len), 0, char_input_dim, jnp.int32)
    out = jax.block_until_ready(
        embeddings_forward(words, chars, word_table, char_table, cnn_w, cnn_b))
    ref = _reference(words, chars, word_table, char_table, cnn_w, cnn_b)
    assert out.shape == (sent_len, batch, word_emb_dim + out_channels)
    # tolerance leaves room for MXU f32 pass rounding in the one-hot gather matmuls
    assert jnp.allclose(out, ref, atol=1e-4, rtol=1e-4), "mismatch vs reference (test 1)"

    # test 2: non-divisible row count -> exercises padding + multi-block grid
    sent_len2, batch2, word_len2 = 25, 5, 12
    kc, kd = jax.random.split(jax.random.PRNGKey(2), 2)
    words2 = jax.random.randint(kc, (sent_len2, batch2), 0, word_input_dim, jnp.int32)
    chars2 = jax.random.randint(kd, (batch2, sent_len2, word_len2), 0, char_input_dim, jnp.int32)
    out2 = jax.block_until_ready(
        embeddings_forward(words2, chars2, word_table, char_table, cnn_w, cnn_b, bn=64))
    ref2 = _reference(words2, chars2, word_table, char_table, cnn_w, cnn_b)
    assert out2.shape == (sent_len2, batch2, word_emb_dim + out_channels)
    assert jnp.allclose(out2, ref2, atol=1e-4, rtol=1e-4), "mismatch vs reference (test 2)"

    print("KERNEL_OK")
</pallas_src>

<mosaic_0001>
module attributes {stable_mosaic.version = 11 : i64} {
  func.func @_embeddings_kernel(%arg0: i32, %arg1: memref<16x1xi32, #tpu.memory_space<vmem>>, %arg2: memref<16x12xi32, #tpu.memory_space<vmem>>, %arg3: memref<50x32xf32, #tpu.memory_space<vmem>>, %arg4: memref<30x64xf32, #tpu.memory_space<vmem>>, %arg5: memref<3x64xf32, #tpu.memory_space<vmem>>, %arg6: memref<1x64xf32, #tpu.memory_space<vmem>>, %arg7: memref<16x96xf32, #tpu.memory_space<vmem>>) attributes {dimension_semantics = [#tpu.dimension_semantics<parallel>], iteration_bounds = array<i64: 1>, scalar_prefetch = 0 : i64, scratch_operands = 0 : i64, tpu.core_type = #tpu.core_type<tc>, window_params = [{transform_indices = @transform_0, window_bounds = array<i64: 16, 1>}, {transform_indices = @transform_1, window_bounds = array<i64: 16, 12>}, {pipeline_mode = #tpu.pipeline_mode<synchronous>, transform_indices = @transform_2, window_bounds = array<i64: 50, 32>}, {pipeline_mode = #tpu.pipeline_mode<synchronous>, transform_indices = @transform_3, window_bounds = array<i64: 30, 64>}, {pipeline_mode = #tpu.pipeline_mode<synchronous>, transform_indices = @transform_4, window_bounds = array<i64: 3, 64>}, {pipeline_mode = #tpu.pipeline_mode<synchronous>, transform_indices = @transform_5, window_bounds = array<i64: 1, 64>}, {transform_indices = @transform_6, window_bounds = array<i64: 16, 96>}]} {
    %c0 = arith.constant 0 : index
    %c0_0 = arith.constant 0 : index
    %0 = vector.load %arg1[%c0, %c0_0] : memref<16x1xi32, #tpu.memory_space<vmem>>, vector<16x1xi32>
    %1 = tpu.iota {dimensions = array<i32: 1>} : vector<16x50xi32>
    %2 = vector.broadcast %0 : vector<16x1xi32> to vector<16x50xi32>
    %3 = arith.cmpi eq, %2, %1 : vector<16x50xi32>
    %4 = arith.extui %3 : vector<16x50xi1> to vector<16x50xi32>
    %5 = arith.sitofp %4 : vector<16x50xi32> to vector<16x50xf32>
    %c0_1 = arith.constant 0 : index
    %c0_2 = arith.constant 0 : index
    %6 = vector.load %arg3[%c0_1, %c0_2] : memref<50x32xf32, #tpu.memory_space<vmem>>, vector<50x32xf32>
    %cst = arith.constant dense<0.000000e+00> : vector<16x32xf32>
    %7 = tpu.matmul %5, %6, %cst {dimension_numbers = #tpu.dot_dimension_numbers<[1], [0], [0], [1], [0, 0, 1, 1], [], []>} : vector<16x50xf32>, vector<50x32xf32>, vector<16x32xf32> -> vector<16x32xf32>
    %c0_3 = arith.constant 0 : index
    %c0_4 = arith.constant 0 : index
    %8 = vector.load %arg7[%c0_3, %c0_4] : memref<16x96xf32, #tpu.memory_space<vmem>>, vector<16x32xf32>
    tpu.vector_store %arg7[%c0_3, %c0_4], %7 {strides = array<i32>} : memref<16x96xf32, #tpu.memory_space<vmem>>, vector<16x32xf32>,
    %c0_5 = arith.constant 0 : index
    %c0_6 = arith.constant 0 : index
    %9 = vector.load %arg2[%c0_5, %c0_6] : memref<16x12xi32, #tpu.memory_space<vmem>>, vector<16x12xi32>
    %c0_7 = arith.constant 0 : index
    %c0_8 = arith.constant 0 : index
    %10 = vector.load %arg4[%c0_7, %c0_8] : memref<30x64xf32, #tpu.memory_space<vmem>>, vector<30x64xf32>
    %c0_9 = arith.constant 0 : index
    %c0_10 = arith.constant 0 : index
    %11 = vector.load %arg5[%c0_9, %c0_10] : memref<3x64xf32, #tpu.memory_space<vmem>>, vector<3x64xf32>
    %12 = tpu.iota {dimensions = array<i32: 1>} : vector<16x30xi32>
    %13 = vector.extract_strided_slice %9 {offsets = [0, 0], sizes = [16, 1], strides = [1, 1]} : vector<16x12xi32> to vector<16x1xi32>
    %14 = vector.broadcast %13 : vector<16x1xi32> to vector<16x30xi32>
    %15 = arith.cmpi eq, %14, %12 : vector<16x30xi32>
    %16 = arith.extui %15 : vector<16x30xi1> to vector<16x30xi32>
    %17 = arith.sitofp %16 : vector<16x30xi32> to vector<16x30xf32>
    %cst_11 = arith.constant dense<0.000000e+00> : vector<16x64xf32>
    %18 = tpu.matmul %17, %10, %cst_11 {dimension_numbers = #tpu.dot_dimension_numbers<[1], [0], [0], [1], [0, 0, 1, 1], [], []>} : vector<16x30xf32>, vector<30x64xf32>, vector<16x64xf32> -> vector<16x64xf32>
    %19 = vector.extract_strided_slice %9 {offsets = [0, 1], sizes = [16, 1], strides = [1, 1]} : vector<16x12xi32> to vector<16x1xi32>
    %20 = vector.broadcast %19 : vector<16x1xi32> to vector<16x30xi32>
    %21 = arith.cmpi eq, %20, %12 : vector<16x30xi32>
    %22 = arith.extui %21 : vector<16x30xi1> to vector<16x30xi32>
    %23 = arith.sitofp %22 : vector<16x30xi32> to vector<16x30xf32>
    %cst_12 = arith.constant dense<0.000000e+00> : vector<16x64xf32>
    %24 = tpu.matmul %23, %10, %cst_12 {dimension_numbers = #tpu.dot_dimension_numbers<[1], [0], [0], [1], [0, 0, 1, 1], [], []>} : vector<16x30xf32>, vector<30x64xf32>, vector<16x64xf32> -> vector<16x64xf32>
    %25 = vector.extract_strided_slice %9 {offsets = [0, 2], sizes = [16, 1], strides = [1, 1]} : vector<16x12xi32> to vector<16x1xi32>
    %26 = vector.broadcast %25 : vector<16x1xi32> to vector<16x30xi32>
    %27 = arith.cmpi eq, %26, %12 : vector<16x30xi32>
    %28 = arith.extui %27 : vector<16x30xi1> to vector<16x30xi32>
    %29 = arith.sitofp %28 : vector<16x30xi32> to vector<16x30xf32>
    %cst_13 = arith.constant dense<0.000000e+00> : vector<16x64xf32>
    %30 = tpu.matmul %29, %10, %cst_13 {dimension_numbers = #tpu.dot_dimension_numbers<[1], [0], [0], [1], [0, 0, 1, 1], [], []>} : vector<16x30xf32>, vector<30x64xf32>, vector<16x64xf32> -> vector<16x64xf32>
    %31 = vector.extract_strided_slice %11 {offsets = [0, 0], sizes = [1, 64], strides = [1, 1]} : vector<3x64xf32> to vector<1x64xf32>
    %32 = vector.broadcast %31 : vector<1x64xf32> to vector<16x64xf32>
    %33 = arith.mulf %18, %32 : vector<16x64xf32>
    %34 = vector.extract_strided_slice %11 {offsets = [1, 0], sizes = [1, 64], strides = [1, 1]} : vector<3x64xf32> to vector<1x64xf32>
    %35 = vector.broadcast %34 : vector<1x64xf32> to vector<16x64xf32>
    %36 = arith.mulf %24, %35 : vector<16x64xf32>
    %37 = arith.addf %33, %36 : vector<16x64xf32>
    %38 = vector.extract_strided_slice %11 {offsets = [2, 0], sizes = [1, 64], strides = [1, 1]} : vector<3x64xf32> to vector<1x64xf32>
    %39 = vector.broadcast %38 : vector<1x64xf32> to vector<16x64xf32>
    %40 = arith.mulf %30, %39 : vector<16x64xf32>
    %41 = arith.addf %37, %40 : vector<16x64xf32>
    %42 = vector.extract_strided_slice %9 {offsets = [0, 3], sizes = [16, 1], strides = [1, 1]} : vector<16x12xi32> to vector<16x1xi32>
    %43 = vector.broadcast %42 : vector<16x1xi32> to vector<16x30xi32>
    %44 = arith.cmpi eq, %43, %12 : vector<16x30xi32>
    %45 = arith.extui %44 : vector<16x30xi1> to vector<16x30xi32>
    %46 = arith.sitofp %45 : vector<16x30xi32> to vector<16x30xf32>
    %cst_14 = arith.constant dense<0.000000e+00> : vector<16x64xf32>
    %47 = tpu.matmul %46, %10, %cst_14 {dimension_numbers = #tpu.dot_dimension_numbers<[1], [0], [0], [1], [0, 0, 1, 1], [], []>} : vector<16x30xf32>, vector<30x64xf32>, vector<16x64xf32> -> vector<16x64xf32>
    %48 = vector.extract_strided_slice %11 {offsets = [0, 0], sizes = [1, 64], strides = [1, 1]} : vector<3x64xf32> to vector<1x64xf32>
    %49 = vector.broadcast %48 : vector<1x64xf32> to vector<16x64xf32>
    %50 = arith.mulf %24, %49 : vector<16x64xf32>
    %51 = vector.extract_strided_slice %11 {offsets = [1, 0], sizes = [1, 64], strides = [1, 1]} : vector<3x64xf32> to vector<1x64xf32>
    %52 = vector.broadcast %51 : vector<1x64xf32> to vector<16x64xf32>
    %53 = arith.mulf %30, %52 : vector<16x64xf32>
    %54 = arith.addf %50, %53 : vector<16x64xf32>
    %55 = vector.extract_strided_slice %11 {offsets = [2, 0], sizes = [1, 64], strides = [1, 1]} : vector<3x64xf32> to vector<1x64xf32>
    %56 = vector.broadcast %55 : vector<1x64xf32> to vector<16x64xf32>
    %57 = arith.mulf %47, %56 : vector<16x64xf32>
    %58 = arith.addf %54, %57 : vector<16x64xf32>
    %59 = arith.maximumf %41, %58 : vector<16x64xf32>
    %60 = vector.extract_strided_slice %9 {offsets = [0, 4], sizes = [16, 1], strides = [1, 1]} : vector<16x12xi32> to vector<16x1xi32>
    %61 = vector.broadcast %60 : vector<16x1xi32> to vector<16x30xi32>
    %62 = arith.cmpi eq, %61, %12 : vector<16x30xi32>
    %63 = arith.extui %62 : vector<16x30xi1> to vector<16x30xi32>
    %64 = arith.sitofp %63 : vector<16x30xi32> to vector<16x30xf32>
    %cst_15 = arith.constant dense<0.000000e+00> : vector<16x64xf32>
    %65 = tpu.matmul %64, %10, %cst_15 {dimension_numbers = #tpu.dot_dimension_numbers<[1], [0], [0], [1], [0, 0, 1, 1], [], []>} : vector<16x30xf32>, vector<30x64xf32>, vector<16x64xf32> -> vector<16x64xf32>
    %66 = vector.extract_strided_slice %11 {offsets = [0, 0], sizes = [1, 64], strides = [1, 1]} : vector<3x64xf32> to vector<1x64xf32>
    %67 = vector.broadcast %66 : vector<1x64xf32> to vector<16x64xf32>
    %68 = arith.mulf %30, %67 : vector<16x64xf32>
    %69 = vector.extract_strided_slice %11 {offsets = [1, 0], sizes = [1, 64], strides = [1, 1]} : vector<3x64xf32> to vector<1x64xf32>
    %70 = vector.broadcast %69 : vector<1x64xf32> to vector<16x64xf32>
    %71 = arith.mulf %47, %70 : vector<16x64xf32>
    %72 = arith.addf %68, %71 : vector<16x64xf32>
    %73 = vector.extract_strided_slice %11 {offsets = [2, 0], sizes = [1, 64], strides = [1, 1]} : vector<3x64xf32> to vector<1x64xf32>
    %74 = vector.broadcast %73 : vector<1x64xf32> to vector<16x64xf32>
    %75 = arith.mulf %65, %74 : vector<16x64xf32>
    %76 = arith.addf %72, %75 : vector<16x64xf32>
    %77 = arith.maximumf %59, %76 : vector<16x64xf32>
    %78 = vector.extract_strided_slice %9 {offsets = [0, 5], sizes = [16, 1], strides = [1, 1]} : vector<16x12xi32> to vector<16x1xi32>
    %79 = vector.broadcast %78 : vector<16x1xi32> to vector<16x30xi32>
    %80 = arith.cmpi eq, %79, %12 : vector<16x30xi32>
    %81 = arith.extui %80 : vector<16x30xi1> to vector<16x30xi32>
    %82 = arith.sitofp %81 : vector<16x30xi32> to vector<16x30xf32>
    %cst_16 = arith.constant dense<0.000000e+00> : vector<16x64xf32>
    %83 = tpu.matmul %82, %10, %cst_16 {dimension_numbers = #tpu.dot_dimension_numbers<[1], [0], [0], [1], [0, 0, 1, 1], [], []>} : vector<16x30xf32>, vector<30x64xf32>, vector<16x64xf32> -> vector<16x64xf32>
    %84 = vector.extract_strided_slice %11 {offsets = [0, 0], sizes = [1, 64], strides = [1, 1]} : vector<3x64xf32> to vector<1x64xf32>
    %85 = vector.broadcast %84 : vector<1x64xf32> to vector<16x64xf32>
    %86 = arith.mulf %47, %85 : vector<16x64xf32>
    %87 = vector.extract_strided_slice %11 {offsets = [1, 0], sizes = [1, 64], strides = [1, 1]} : vector<3x64xf32> to vector<1x64xf32>
    %88 = vector.broadcast %87 : vector<1x64xf32> to vector<16x64xf32>
    %89 = arith.mulf %65, %88 : vector<16x64xf32>
    %90 = arith.addf %86, %89 : vector<16x64xf32>
    %91 = vector.extract_strided_slice %11 {offsets = [2, 0], sizes = [1, 64], strides = [1, 1]} : vector<3x64xf32> to vector<1x64xf32>
    %92 = vector.broadcast %91 : vector<1x64xf32> to vector<16x64xf32>
    %93 = arith.mulf %83, %92 : vector<16x64xf32>
    %94 = arith.addf %90, %93 : vector<16x64xf32>
    %95 = arith.maximumf %77, %94 : vector<16x64xf32>
    %96 = vector.extract_strided_slice %9 {offsets = [0, 6], sizes = [16, 1], strides = [1, 1]} : vector<16x12xi32> to vector<16x1xi32>
    %97 = vector.broadcast %96 : vector<16x1xi32> to vector<16x30xi32>
    %98 = arith.cmpi eq, %97, %12 : vector<16x30xi32>
    %99 = arith.extui %98 : vector<16x30xi1> to vector<16x30xi32>
    %100 = arith.sitofp %99 : vector<16x30xi32> to vector<16x30xf32>
    %cst_17 = arith.constant dense<0.000000e+00> : vector<16x64xf32>
    %101 = tpu.matmul %100, %10, %cst_17 {dimension_numbers = #tpu.dot_dimension_numbers<[1], [0], [0], [1], [0, 0, 1, 1], [], []>} : vector<16x30xf32>, vector<30x64xf32>, vector<16x64xf32> -> vector<16x64xf32>
    %102 = vector.extract_strided_slice %11 {offsets = [0, 0], sizes = [1, 64], strides = [1, 1]} : vector<3x64xf32> to vector<1x64xf32>
    %103 = vector.broadcast %102 : vector<1x64xf32> to vector<16x64xf32>
    %104 = arith.mulf %65, %103 : vector<16x64xf32>
    %105 = vector.extract_strided_slice %11 {offsets = [1, 0], sizes = [1, 64], strides = [1, 1]} : vector<3x64xf32> to vector<1x64xf32>
    %106 = vector.broadcast %105 : vector<1x64xf32> to vector<16x64xf32>
    %107 = arith.mulf %83, %106 : vector<16x64xf32>
    %108 = arith.addf %104, %107 : vector<16x64xf32>
    %109 = vector.extract_strided_slice %11 {offsets = [2, 0], sizes = [1, 64], strides = [1, 1]} : vector<3x64xf32> to vector<1x64xf32>
    %110 = vector.broadcast %109 : vector<1x64xf32> to vector<16x64xf32>
    %111 = arith.mulf %101, %110 : vector<16x64xf32>
    %112 = arith.addf %108, %111 : vector<16x64xf32>
    %113 = arith.maximumf %95, %112 : vector<16x64xf32>
    %114 = vector.extract_strided_slice %9 {offsets = [0, 7], sizes = [16, 1], strides = [1, 1]} : vector<16x12xi32> to vector<16x1xi32>
    %115 = vector.broadcast %114 : vector<16x1xi32> to vector<16x30xi32>
    %116 = arith.cmpi eq, %115, %12 : vector<16x30xi32>
    %117 = arith.extui %116 : vector<16x30xi1> to vector<16x30xi32>
    %118 = arith.sitofp %117 : vector<16x30xi32> to vector<16x30xf32>
    %cst_18 = arith.constant dense<0.000000e+00> : vector<16x64xf32>
    %119 = tpu.matmul %118, %10, %cst_18 {dimension_numbers = #tpu.dot_dimension_numbers<[1], [0], [0], [1], [0, 0, 1, 1], [], []>} : vector<16x30xf32>, vector<30x64xf32>, vector<16x64xf32> -> vector<16x64xf32>
    %120 = vector.extract_strided_slice %11 {offsets = [0, 0], sizes = [1, 64], strides = [1, 1]} : vector<3x64xf32> to vector<1x64xf32>
    %121 = vector.broadcast %120 : vector<1x64xf32> to vector<16x64xf32>
    %122 = arith.mulf %83, %121 : vector<16x64xf32>
    %123 = vector.extract_strided_slice %11 {offsets = [1, 0], sizes = [1, 64], strides = [1, 1]} : vector<3x64xf32> to vector<1x64xf32>
    %124 = vector.broadcast %123 : vector<1x64xf32> to vector<16x64xf32>
    %125 = arith.mulf %101, %124 : vector<16x64xf32>
    %126 = arith.addf %122, %125 : vector<16x64xf32>
    %127 = vector.extract_strided_slice %11 {offsets = [2, 0], sizes = [1, 64], strides = [1, 1]} : vector<3x64xf32> to vector<1x64xf32>
    %128 = vector.broadcast %127 : vector<1x64xf32> to vector<16x64xf32>
    %129 = arith.mulf %119, %128 : vector<16x64xf32>
    %130 = arith.addf %126, %129 : vector<16x64xf32>
    %131 = arith.maximumf %113, %130 : vector<16x64xf32>
    %132 = vector.extract_strided_slice %9 {offsets = [0, 8], sizes = [16, 1], strides = [1, 1]} : vector<16x12xi32> to vector<16x1xi32>
    %133 = vector.broadcast %132 : vector<16x1xi32> to vector<16x30xi32>
    %134 = arith.cmpi eq, %133, %12 : vector<16x30xi32>
    %135 = arith.extui %134 : vector<16x30xi1> to vector<16x30xi32>
    %136 = arith.sitofp %135 : vector<16x30xi32> to vector<16x30xf32>
    %cst_19 = arith.constant dense<0.000000e+00> : vector<16x64xf32>
    %137 = tpu.matmul %136, %10, %cst_19 {dimension_numbers = #tpu.dot_dimension_numbers<[1], [0], [0], [1], [0, 0, 1, 1], [], []>} : vector<16x30xf32>, vector<30x64xf32>, vector<16x64xf32> -> vector<16x64xf32>
    %138 = vector.extract_strided_slice %11 {offsets = [0, 0], sizes = [1, 64], strides = [1, 1]} : vector<3x64xf32> to vector<1x64xf32>
    %139 = vector.broadcast %138 : vector<1x64xf32> to vector<16x64xf32>
    %140 = arith.mulf %101, %139 : vector<16x64xf32>
    %141 = vector.extract_strided_slice %11 {offsets = [1, 0], sizes = [1, 64], strides = [1, 1]} : vector<3x64xf32> to vector<1x64xf32>
    %142 = vector.broadcast %141 : vector<1x64xf32> to vector<16x64xf32>
    %143 = arith.mulf %119, %142 : vector<16x64xf32>
    %144 = arith.addf %140, %143 : vector<16x64xf32>
    %145 = vector.extract_strided_slice %11 {offsets = [2, 0], sizes = [1, 64], strides = [1, 1]} : vector<3x64xf32> to vector<1x64xf32>
    %146 = vector.broadcast %145 : vector<1x64xf32> to vector<16x64xf32>
    %147 = arith.mulf %137, %146 : vector<16x64xf32>
    %148 = arith.addf %144, %147 : vector<16x64xf32>
    %149 = arith.maximumf %131, %148 : vector<16x64xf32>
    %150 = vector.extract_strided_slice %9 {offsets = [0, 9], sizes = [16, 1], strides = [1, 1]} : vector<16x12xi32> to vector<16x1xi32>
    %151 = vector.broadcast %150 : vector<16x1xi32> to vector<16x30xi32>
    %152 = arith.cmpi eq, %151, %12 : vector<16x30xi32>
    %153 = arith.extui %152 : vector<16x30xi1> to vector<16x30xi32>
    %154 = arith.sitofp %153 : vector<16x30xi32> to vector<16x30xf32>
    %cst_20 = arith.constant dense<0.000000e+00> : vector<16x64xf32>
    %155 = tpu.matmul %154, %10, %cst_20 {dimension_numbers = #tpu.dot_dimension_numbers<[1], [0], [0], [1], [0, 0, 1, 1], [], []>} : vector<16x30xf32>, vector<30x64xf32>, vector<16x64xf32> -> vector<16x64xf32>
    %156 = vector.extract_strided_slice %11 {offsets = [0, 0], sizes = [1, 64], strides = [1, 1]} : vector<3x64xf32> to vector<1x64xf32>
    %157 = vector.broadcast %156 : vector<1x64xf32> to vector<16x64xf32>
    %158 = arith.mulf %119, %157 : vector<16x64xf32>
    %159 = vector.extract_strided_slice %11 {offsets = [1, 0], sizes = [1, 64], strides = [1, 1]} : vector<3x64xf32> to vector<1x64xf32>
    %160 = vector.broadcast %159 : vector<1x64xf32> to vector<16x64xf32>
    %161 = arith.mulf %137, %160 : vector<16x64xf32>
    %162 = arith.addf %158, %161 : vector<16x64xf32>
    %163 = vector.extract_strided_slice %11 {offsets = [2, 0], sizes = [1, 64], strides = [1, 1]} : vector<3x64xf32> to vector<1x64xf32>
    %164 = vector.broadcast %163 : vector<1x64xf32> to vector<16x64xf32>
    %165 = arith.mulf %155, %164 : vector<16x64xf32>
    %166 = arith.addf %162, %165 : vector<16x64xf32>
    %167 = arith.maximumf %149, %166 : vector<16x64xf32>
    %168 = vector.extract_strided_slice %9 {offsets = [0, 10], sizes = [16, 1], strides = [1, 1]} : vector<16x12xi32> to vector<16x1xi32>
    %169 = vector.broadcast %168 : vector<16x1xi32> to vector<16x30xi32>
    %170 = arith.cmpi eq, %169, %12 : vector<16x30xi32>
    %171 = arith.extui %170 : vector<16x30xi1> to vector<16x30xi32>
    %172 = arith.sitofp %171 : vector<16x30xi32> to vector<16x30xf32>
    %cst_21 = arith.constant dense<0.000000e+00> : vector<16x64xf32>
    %173 = tpu.matmul %172, %10, %cst_21 {dimension_numbers = #tpu.dot_dimension_numbers<[1], [0], [0], [1], [0, 0, 1, 1], [], []>} : vector<16x30xf32>, vector<30x64xf32>, vector<16x64xf32> -> vector<16x64xf32>
    %174 = vector.extract_strided_slice %11 {offsets = [0, 0], sizes = [1, 64], strides = [1, 1]} : vector<3x64xf32> to vector<1x64xf32>
    %175 = vector.broadcast %174 : vector<1x64xf32> to vector<16x64xf32>
    %176 = arith.mulf %137, %175 : vector<16x64xf32>
    %177 = vector.extract_strided_slice %11 {offsets = [1, 0], sizes = [1, 64], strides = [1, 1]} : vector<3x64xf32> to vector<1x64xf32>
    %178 = vector.broadcast %177 : vector<1x64xf32> to vector<16x64xf32>
    %179 = arith.mulf %155, %178 : vector<16x64xf32>
    %180 = arith.addf %176, %179 : vector<16x64xf32>
    %181 = vector.extract_strided_slice %11 {offsets = [2, 0], sizes = [1, 64], strides = [1, 1]} : vector<3x64xf32> to vector<1x64xf32>
    %182 = vector.broadcast %181 : vector<1x64xf32> to vector<16x64xf32>
    %183 = arith.mulf %173, %182 : vector<16x64xf32>
    %184 = arith.addf %180, %183 : vector<16x64xf32>
    %185 = arith.maximumf %167, %184 : vector<16x64xf32>
    %186 = vector.extract_strided_slice %9 {offsets = [0, 11], sizes = [16, 1], strides = [1, 1]} : vector<16x12xi32> to vector<16x1xi32>
    %187 = vector.broadcast %186 : vector<16x1xi32> to vector<16x30xi32>
    %188 = arith.cmpi eq, %187, %12 : vector<16x30xi32>
    %189 = arith.extui %188 : vector<16x30xi1> to vector<16x30xi32>
    %190 = arith.sitofp %189 : vector<16x30xi32> to vector<16x30xf32>
    %cst_22 = arith.constant dense<0.000000e+00> : vector<16x64xf32>
    %191 = tpu.matmul %190, %10, %cst_22 {dimension_numbers = #tpu.dot_dimension_numbers<[1], [0], [0], [1], [0, 0, 1, 1], [], []>} : vector<16x30xf32>, vector<30x64xf32>, vector<16x64xf32> -> vector<16x64xf32>
    %192 = vector.extract_strided_slice %11 {offsets = [0, 0], sizes = [1, 64], strides = [1, 1]} : vector<3x64xf32> to vector<1x64xf32>
    %193 = vector.broadcast %192 : vector<1x64xf32> to vector<16x64xf32>
    %194 = arith.mulf %155, %193 : vector<16x64xf32>
    %195 = vector.extract_strided_slice %11 {offsets = [1, 0], sizes = [1, 64], strides = [1, 1]} : vector<3x64xf32> to vector<1x64xf32>
    %196 = vector.broadcast %195 : vector<1x64xf32> to vector<16x64xf32>
    %197 = arith.mulf %173, %196 : vector<16x64xf32>
    %198 = arith.addf %194, %197 : vector<16x64xf32>
    %199 = vector.extract_strided_slice %11 {offsets = [2, 0], sizes = [1, 64], strides = [1, 1]} : vector<3x64xf32> to vector<1x64xf32>
    %200 = vector.broadcast %199 : vector<1x64xf32> to vector<16x64xf32>
    %201 = arith.mulf %191, %200 : vector<16x64xf32>
    %202 = arith.addf %198, %201 : vector<16x64xf32>
    %203 = arith.maximumf %185, %202 : vector<16x64xf32>
    %c0_23 = arith.constant 0 : index
    %c0_24 = arith.constant 0 : index
    %204 = vector.load %arg6[%c0_23, %c0_24] : memref<1x64xf32, #tpu.memory_space<vmem>>, vector<1x64xf32>
    %205 = vector.broadcast %204 : vector<1x64xf32> to vector<16x64xf32>
    %206 = arith.addf %203, %205 : vector<16x64xf32>
    %c0_25 = arith.constant 0 : index
    %c32 = arith.constant 32 : index
    %207 = vector.load %arg7[%c0_25, %c32] : memref<16x96xf32, #tpu.memory_space<vmem>>, vector<16x64xf32>
    tpu.vector_store %arg7[%c0_25, %c32], %206 {strides = array<i32>} : memref<16x96xf32, #tpu.memory_space<vmem>>, vector<16x64xf32>,
    return
  }
  func.func @transform_0(%arg0: i32) -> (i32, i32) {
    %c0_i32 = arith.constant 0 : i32
    %c0_i32_0 = arith.constant 0 : i32
    return %arg0, %c0_i32 : i32, i32
  }
  func.func @transform_1(%arg0: i32) -> (i32, i32) {
    %c0_i32 = arith.constant 0 : i32
    %c0_i32_0 = arith.constant 0 : i32
    return %arg0, %c0_i32 : i32, i32
  }
  func.func @transform_2(%arg0: i32) -> (i32, i32) {
    %c0_i32 = arith.constant 0 : i32
    %c0_i32_0 = arith.constant 0 : i32
    %c0_i32_1 = arith.constant 0 : i32
    return %c0_i32, %c0_i32_0 : i32, i32
  }
  func.func @transform_3(%arg0: i32) -> (i32, i32) {
    %c0_i32 = arith.constant 0 : i32
    %c0_i32_0 = arith.constant 0 : i32
    %c0_i32_1 = arith.constant 0 : i32
    return %c0_i32, %c0_i32_0 : i32, i32
  }
  func.func @transform_4(%arg0: i32) -> (i32, i32) {
    %c0_i32 = arith.constant 0 : i32
    %c0_i32_0 = arith.constant 0 : i32
    %c0_i32_1 = arith.constant 0 : i32
    return %c0_i32, %c0_i32_0 : i32, i32
  }
  func.func @transform_5(%arg0: i32) -> (i32, i32) {
    %c0_i32 = arith.constant 0 : i32
    %c0_i32_0 = arith.constant 0 : i32
    %c0_i32_1 = arith.constant 0 : i32
    return %c0_i32, %c0_i32_0 : i32, i32
  }
  func.func @transform_6(%arg0: i32) -> (i32, i32) {
    %c0_i32 = arith.constant 0 : i32
    %c0_i32_0 = arith.constant 0 : i32
    return %arg0, %c0_i32 : i32, i32
  }
}

</mosaic_0001>

<llo_original>
// kernel: tpu_custom_call.1
$region0: #{tpu_custom_call.1}
  #allocation0 [shape = 'u32[]', space=smem, size = 0x4, offset = 0x4, fixed_abs, tag = 'smem constant byte address 0x4 - core index']
  #allocation1 [shape = 'u32[72,128]{1,0:T(1,128)}', space=vmem, size = 0x9000, scoped, tag = 'internal scratch']
  %s0 = inlined_call_operand.vmem [shape: s32[16,1], index: 0, kind: input, shape index: {}]
  %s1 = inlined_call_operand.vmem [shape: s32[16,12], index: 1, kind: input, shape index: {}]
  %s2 = inlined_call_operand.vmem [shape: f32[50,32], index: 2, kind: input, shape index: {}]
  %s3 = inlined_call_operand.vmem [shape: f32[30,64], index: 3, kind: input, shape index: {}]
  %s4 = inlined_call_operand.vmem [shape: f32[3,64], index: 4, kind: input, shape index: {}]
  %s5 = inlined_call_operand.vmem [shape: f32[1,64], index: 5, kind: input, shape index: {}]
  %s6 = inlined_call_operand.hbm [shape: f32[16,96], index: 6, kind: output, shape index: {}]
  %s7 = sld [smem:[#allocation0]]
  $region34: #{tpu_custom_call.1} parent=0
    _
  %s9 = ssub.s32 1, %s7
  %s10 = scalar_select 0, %s9, %s7
  $region1: #{tpu_custom_call.1} parent=0
    #allocation2 [shape = 'u8[8192]{0}', space=vmem, size = 0x2000, scoped, tag = 'output window, operand 0, single buffered']
    #allocation3 [shape = 's32[1]{0}', space=sflag, size = 0x4, scoped, tag = 'scoped memory for tpu_custom_call.1']
    %11 = vsyncpa [#allocation3], 0
    // Predicated region
    $region2: #{tpu_custom_call.1} parent=1 // pred_check
      _
    $region3: #{tpu_custom_call.1} parent=1 // pred_check_branch
      %13 = sbr.rel (0) target = $region5
    $region4: #{tpu_custom_call.1} parent=1 // pred_region
      _
    $region5: #{tpu_custom_call.1} parent=1 // pred_fallthru
      _
    // Predicated region
    $region6: #{tpu_custom_call.1} parent=1 // pred_check
      _
    $region7: #{tpu_custom_call.1} parent=1 // pred_check_branch
      %15 = sbr.rel (0) target = $region9
    $region8: #{tpu_custom_call.1} parent=1 // pred_region
      _
    $region9: #{tpu_custom_call.1} parent=1 // pred_fallthru
      _
    // Predicated region
    $region10: #{tpu_custom_call.1} parent=1 // pred_check
      _
    $region11: #{tpu_custom_call.1} parent=1 // pred_check_branch
      %17 = sbr.rel (0) target = $region13
    $region12: #{tpu_custom_call.1} parent=1 // pred_region
      _
    $region13: #{tpu_custom_call.1} parent=1 // pred_fallthru
      _
    // Predicated region
    $region14: #{tpu_custom_call.1} parent=1 // pred_check
      _
    $region15: #{tpu_custom_call.1} parent=1 // pred_check_branch
      %19 = sbr.rel (0) target = $region17
    $region16: #{tpu_custom_call.1} parent=1 // pred_region
      _
    $region17: #{tpu_custom_call.1} parent=1 // pred_fallthru
      _
    // Predicated region
    $region18: #{tpu_custom_call.1} parent=1 // pred_check
      _
    $region19: #{tpu_custom_call.1} parent=1 // pred_check_branch
      %21 = sbr.rel (0) target = $region21
    $region20: #{tpu_custom_call.1} parent=1 // pred_region
      _
    $region21: #{tpu_custom_call.1} parent=1 // pred_fallthru
      _
    // Predicated region
    $region22: #{tpu_custom_call.1} parent=1 // pred_check
      _
    $region23: #{tpu_custom_call.1} parent=1 // pred_check_branch
      %23 = sbr.rel (0) target = $region25
    $region24: #{tpu_custom_call.1} parent=1 // pred_region
      _
    $region25: #{tpu_custom_call.1} parent=1 // pred_fallthru
      _
    %v24 = vld [vmem:[%s0] sm:$0xff]
    %v25 = vld [vmem:[%s0 + $0x8] sm:$0xff]
    %v26 = vlaneseq
    %v27 = vand.u32 %v26, 127
    %28 = vset.pattern.permute.xlu0 0
    %29 = vperm.xlu0 %28, %v24
    %v30 = vpop.permute.xlu0 %29
    %31 = vset.pattern.permute.xlu0 0
    %32 = vperm.xlu0 %31, %v25
    %v33 = vpop.permute.xlu0 %32
    %vm34 = vcmp.eq.s32.totalorder %v30, %v27
    %vm35 = vcmp.eq.s32.totalorder %v33, %v27
    %v36 = vsel %vm34, 1, 0
    %v37 = vsel %vm35, 1, 0
    %v38 = vcvt.s32.f32 %v36
    %v39 = vcvt.s32.f32 %v37
    %v40 = vld [vmem:[%s2] sm:$0xff]
    %v41 = vld [vmem:[%s2 + $0x8] sm:$0xff]
    %v42 = vld [vmem:[%s2 + $0x10] sm:$0xff]
    %v43 = vld [vmem:[%s2 + $0x18] sm:$0xff]
    %v44 = vld [vmem:[%s2 + $0x20] sm:$0xff]
    %v45 = vld [vmem:[%s2 + $0x28] sm:$0xff]
    %v46 = vld [vmem:[%s2 + $0x30] sm:$0x3]
    %vm47 = vcmask 408576
    %v49 = vsel %vm47, %v38, 0
    %v52 = vsel %vm47, %v39, 0
    %vm54 = vcmask 1041408
    %v56 = vsel %vm54, %v46, 0
    %58 = vmatpush.msra.mxu0 0.0
    %59 = vmatpush.msra.mxu0 0.0
    %60 = vmatpush.msra.mxu0 0.0
    %61 = vmatpush.msra.mxu0 0.0
    %62 = vmatpush.msra.mxu0 0.0
    %63 = vmatpush.msra.mxu0 0.0
    %64 = vmatpush.msra.mxu0 0.0
    %65 = vmatpush.msra.mxu0 0.0
    %66 = vmatpush.msra.mxu0 0.0
    %67 = vmatpush.msra.mxu0 %v56
    %68 = vmatpush.msra.mxu0 %v45
    %69 = vmatpush.msra.mxu0 %v44
    %70 = vmatpush.msra.mxu0 %v43
    %71 = vmatpush.msra.mxu0 %v42
    %72 = vmatpush.msra.mxu0 %v41
    %73 = vmatpush.msra.mxu0 %v40
    %74 = vmatmul.f32.gmra.mxu0 %v49
    %v75 = vpop.f32.mrf.mxu0
    %v76 = vadd.f32 0.0, %v75
    %77 = vmatmul.f32.gmra.mxu0 %v52
    %v78 = vpop.f32.mrf.mxu0
    %v79 = vadd.f32 0.0, %v78
    %80 = vdwg.mxu0
    %vm81 = vcmask 261120
    %82 = vst.msk [vmem:[#allocation2] sm:$0xff] %vm81, %v76
    %83 = vst.msk [vmem:[#allocation2 + $0x8] sm:$0xff] %vm81, %v79
    %v84 = vld [vmem:[%s1] sm:$0xff]
    %v85 = vld [vmem:[%s1 + $0x8] sm:$0xff]
    %v86 = vld [vmem:[%s3] sm:$0xff]
    %v87 = vld [vmem:[%s3 + $0x8] sm:$0xff]
    %v88 = vld [vmem:[%s3 + $0x10] sm:$0xff]
    %v89 = vld [vmem:[%s3 + $0x18] sm:$0x3f]
    %v90 = vld [vmem:[%s4] sm:$0x7]
    %91 = vset.pattern.permute.xlu0 0
    %92 = vperm.xlu0 %91, %v84
    %v93 = vpop.permute.xlu0 %92
    %94 = vset.pattern.permute.xlu0 0
    %95 = vperm.xlu0 %94, %v85
    %v96 = vpop.permute.xlu0 %95
    %vm97 = vcmp.eq.s32.totalorder %v93, %v27
    %vm98 = vcmp.eq.s32.totalorder %v96, %v27
    %v99 = vsel %vm97, 1, 0
    %v100 = vsel %vm98, 1, 0
    %v101 = vcvt.s32.f32 %v99
    %v102 = vcvt.s32.f32 %v100
    %vm103 = vcmask 244736
    %v105 = vsel %vm103, %v101, 0
    %v108 = vsel %vm103, %v102, 0
    %vm110 = vcmask 1045504
    %v112 = vsel %vm110, %v89, 0
    %114 = vmatpush.msra.mxu0 0.0
    %115 = vmatpush.msra.mxu0 0.0
    %116 = vmatpush.msra.mxu0 0.0
    %117 = vmatpush.msra.mxu0 0.0
    %118 = vmatpush.msra.mxu0 0.0
    %119 = vmatpush.msra.mxu0 0.0
    %120 = vmatpush.msra.mxu0 0.0
    %121 = vmatpush.msra.mxu0 0.0
    %122 = vmatpush.msra.mxu0 0.0
    %123 = vmatpush.msra.mxu0 0.0
    %124 = vmatpush.msra.mxu0 0.0
    %125 = vmatpush.msra.mxu0 0.0
    %126 = vmatpush.msra.mxu0 %v112
    %127 = vmatpush.msra.mxu0 %v88
    %128 = vmatpush.msra.mxu0 %v87
    %129 = vmatpush.msra.mxu0 %v86
    %130 = vmatmul.f32.gmra.mxu0 %v105
    %v131 = vpop.f32.mrf.mxu0
    %v132 = vadd.f32 0.0, %v131
    %133 = vmatmul.f32.gmra.mxu0 %v108
    %v134 = vpop.f32.mrf.mxu0
    %v135 = vadd.f32 0.0, %v134
    %136 = vdwg.mxu0
    %137 = vset.pattern.permute.xlu0 1
    %138 = vperm.xlu0 %137, %v84
    %v139 = vpop.permute.xlu0 %138
    %140 = vset.pattern.permute.xlu0 1
    %141 = vperm.xlu0 %140, %v85
    %v142 = vpop.permute.xlu0 %141
    %vm143 = vcmp.eq.s32.totalorder %v139, %v27
    %vm144 = vcmp.eq.s32.totalorder %v142, %v27
    %v145 = vsel %vm143, 1, 0
    %v146 = vsel %vm144, 1, 0
    %v147 = vcvt.s32.f32 %v145
    %v148 = vcvt.s32.f32 %v146
    %v150 = vsel %vm103, %v147, 0
    %v153 = vsel %vm103, %v148, 0
    %155 = vmatpush.msra.mxu0 0.0
    %156 = vmatpush.msra.mxu0 0.0
    %157 = vmatpush.msra.mxu0 0.0
    %158 = vmatpush.msra.mxu0 0.0
    %159 = vmatpush.msra.mxu0 0.0
    %160 = vmatpush.msra.mxu0 0.0
    %161 = vmatpush.msra.mxu0 0.0
    %162 = vmatpush.msra.mxu0 0.0
    %163 = vmatpush.msra.mxu0 0.0
    %164 = vmatpush.msra.mxu0 0.0
    %165 = vmatpush.msra.mxu0 0.0
    %166 = vmatpush.msra.mxu0 0.0
    %167 = vmatpush.msra.mxu0 %v112
    %168 = vmatpush.msra.mxu0 %v88
    %169 = vmatpush.msra.mxu0 %v87
    %170 = vmatpush.msra.mxu0 %v86
    %171 = vmatmul.f32.gmra.mxu0 %v150
    %v172 = vpop.f32.mrf.mxu0
    %v173 = vadd.f32 0.0, %v172
    %174 = vmatmul.f32.gmra.mxu0 %v153
    %v175 = vpop.f32.mrf.mxu0
    %v176 = vadd.f32 0.0, %v175
    %177 = vdwg.mxu0
    %178 = vset.pattern.permute.xlu0 2
    %179 = vperm.xlu0 %178, %v84
    %v180 = vpop.permute.xlu0 %179
    %181 = vset.pattern.permute.xlu0 2
    %182 = vperm.xlu0 %181, %v85
    %v183 = vpop.permute.xlu0 %182
    %vm184 = vcmp.eq.s32.totalorder %v180, %v27
    %vm185 = vcmp.eq.s32.totalorder %v183, %v27
    %v186 = vsel %vm184, 1, 0
    %v187 = vsel %vm185, 1, 0
    %v188 = vcvt.s32.f32 %v186
    %v189 = vcvt.s32.f32 %v187
    %v191 = vsel %vm103, %v188, 0
    %v194 = vsel %vm103, %v189, 0
    %196 = vmatpush.msra.mxu0 0.0
    %197 = vmatpush.msra.mxu0 0.0
    %198 = vmatpush.msra.mxu0 0.0
    %199 = vmatpush.msra.mxu0 0.0
    %200 = vmatpush.msra.mxu0 0.0
    %201 = vmatpush.msra.mxu0 0.0
    %202 = vmatpush.msra.mxu0 0.0
    %203 = vmatpush.msra.mxu0 0.0
    %204 = vmatpush.msra.mxu0 0.0
    %205 = vmatpush.msra.mxu0 0.0
    %206 = vmatpush.msra.mxu0 0.0
    %207 = vmatpush.msra.mxu0 0.0
    %208 = vmatpush.msra.mxu0 %v112
    %209 = vmatpush.msra.mxu0 %v88
    %210 = vmatpush.msra.mxu0 %v87
    %211 = vmatpush.msra.mxu0 %v86
    %212 = vmatmul.f32.gmra.mxu0 %v191
    %v213 = vpop.f32.mrf.mxu0
    %v214 = vadd.f32 0.0, %v213
    %215 = vmatmul.f32.gmra.mxu0 %v194
    %v216 = vpop.f32.mrf.mxu0
    %v217 = vadd.f32 0.0, %v216
    %218 = vdwg.mxu0
    %v219 = vperm.slane %v90, 0
    %v220 = vmul.f32 %v132, %v219
    %v221 = vmul.f32 %v135, %v219
    %v222 = vperm.slane %v90, 1
    %v223 = vmul.f32 %v173, %v222
    %v224 = vmul.f32 %v176, %v222
    %v225 = vadd.f32 %v220, %v223
    %v226 = vadd.f32 %v221, %v224
    %v227 = vperm.slane %v90, 2
    %v228 = vmul.f32 %v214, %v227
    %v229 = vmul.f32 %v217, %v227
    %v230 = vadd.f32 %v225, %v228
    %v231 = vadd.f32 %v226, %v229
    %232 = vset.pattern.permute.xlu0 3
    %233 = vperm.xlu0 %232, %v84
    %v234 = vpop.permute.xlu0 %233
    %235 = vset.pattern.permute.xlu0 3
    %236 = vperm.xlu0 %235, %v85
    %v237 = vpop.permute.xlu0 %236
    %vm238 = vcmp.eq.s32.totalorder %v234, %v27
    %vm239 = vcmp.eq.s32.totalorder %v237, %v27
    %v240 = vsel %vm238, 1, 0
    %v241 = vsel %vm239, 1, 0
    %v242 = vcvt.s32.f32 %v240
    %v243 = vcvt.s32.f32 %v241
    %v245 = vsel %vm103, %v242, 0
    %v248 = vsel %vm103, %v243, 0
    %250 = vmatpush.msra.mxu0 0.0
    %251 = vmatpush.msra.mxu0 0.0
    %252 = vmatpush.msra.mxu0 0.0
    %253 = vmatpush.msra.mxu0 0.0
    %254 = vmatpush.msra.mxu0 0.0
    %255 = vmatpush.msra.mxu0 0.0
    %256 = vmatpush.msra.mxu0 0.0
    %257 = vmatpush.msra.mxu0 0.0
    %258 = vmatpush.msra.mxu0 0.0
    %259 = vmatpush.msra.mxu0 0.0
    %260 = vmatpush.msra.mxu0 0.0
    %261 = vmatpush.msra.mxu0 0.0
    %262 = vmatpush.msra.mxu0 %v112
    %263 = vmatpush.msra.mxu0 %v88
    %264 = vmatpush.msra.mxu0 %v87
    %265 = vmatpush.msra.mxu0 %v86
    %266 = vmatmul.f32.gmra.mxu0 %v245
    %v267 = vpop.f32.mrf.mxu0
    %v268 = vadd.f32 0.0, %v267
    %269 = vmatmul.f32.gmra.mxu0 %v248
    %v270 = vpop.f32.mrf.mxu0
    %v271 = vadd.f32 0.0, %v270
    %272 = vdwg.mxu0
    %v273 = vmul.f32 %v173, %v219
    %v274 = vmul.f32 %v176, %v219
    %v275 = vmul.f32 %v214, %v222
    %v276 = vmul.f32 %v217, %v222
    %v277 = vadd.f32 %v273, %v275
    %v278 = vadd.f32 %v274, %v276
    %v279 = vmul.f32 %v268, %v227
    %v280 = vmul.f32 %v271, %v227
    %v281 = vadd.f32 %v277, %v279
    %v282 = vadd.f32 %v278, %v280
    %v283 = vmax.f32 %v230, %v281
    %v284 = vmax.f32 %v231, %v282
    %285 = vset.pattern.permute.xlu0 4
    %286 = vperm.xlu0 %285, %v84
    %v287 = vpop.permute.xlu0 %286
    %288 = vset.pattern.permute.xlu0 4
    %289 = vperm.xlu0 %288, %v85
    %v290 = vpop.permute.xlu0 %289
    %vm291 = vcmp.eq.s32.totalorder %v287, %v27
    %vm292 = vcmp.eq.s32.totalorder %v290, %v27
    %v293 = vsel %vm291, 1, 0
    %v294 = vsel %vm292, 1, 0
    %v295 = vcvt.s32.f32 %v293
    %v296 = vcvt.s32.f32 %v294
    %v298 = vsel %vm103, %v295, 0
    %v301 = vsel %vm103, %v296, 0
    %303 = vmatpush.msra.mxu0 0.0
    %304 = vmatpush.msra.mxu0 0.0
    %305 = vmatpush.msra.mxu0 0.0
    %306 = vmatpush.msra.mxu0 0.0
    %307 = vmatpush.msra.mxu0 0.0
    %308 = vmatpush.msra.mxu0 0.0
    %309 = vmatpush.msra.mxu0 0.0
    %310 = vmatpush.msra.mxu0 0.0
    %311 = vmatpush.msra.mxu0 0.0
    %312 = vmatpush.msra.mxu0 0.0
    %313 = vmatpush.msra.mxu0 0.0
    %314 = vmatpush.msra.mxu0 0.0
    %315 = vmatpush.msra.mxu0 %v112
    %316 = vmatpush.msra.mxu0 %v88
    %317 = vmatpush.msra.mxu0 %v87
    %318 = vmatpush.msra.mxu0 %v86
    %319 = vmatmul.f32.gmra.mxu0 %v298
    %v320 = vpop.f32.mrf.mxu0
    %v321 = vadd.f32 0.0, %v320
    %322 = vmatmul.f32.gmra.mxu0 %v301
    %v323 = vpop.f32.mrf.mxu0
    %v324 = vadd.f32 0.0, %v323
    %325 = vdwg.mxu0
    %v326 = vmul.f32 %v214, %v219
    %v327 = vmul.f32 %v217, %v219
    %v328 = vmul.f32 %v268, %v222
    %v329 = vmul.f32 %v271, %v222
    %v330 = vadd.f32 %v326, %v328
    %v331 = vadd.f32 %v327, %v329
    %v332 = vmul.f32 %v321, %v227
    %v333 = vmul.f32 %v324, %v227
    %v334 = vadd.f32 %v330, %v332
    %v335 = vadd.f32 %v331, %v333
    %v336 = vmax.f32 %v283, %v334
    %v337 = vmax.f32 %v284, %v335
    %338 = vset.pattern.permute.xlu0 5
    %339 = vperm.xlu0 %338, %v84
    %v340 = vpop.permute.xlu0 %339
    %341 = vset.pattern.permute.xlu0 5
    %342 = vperm.xlu0 %341, %v85
    %v343 = vpop.permute.xlu0 %342
    %vm344 = vcmp.eq.s32.totalorder %v340, %v27
    %vm345 = vcmp.eq.s32.totalorder %v343, %v27
    %v346 = vsel %vm344, 1, 0
    %v347 = vsel %vm345, 1, 0
    %v348 = vcvt.s32.f32 %v346
    %v349 = vcvt.s32.f32 %v347
    %v351 = vsel %vm103, %v348, 0
    %v354 = vsel %vm103, %v349, 0
    %356 = vmatpush.msra.mxu0 0.0
    %357 = vmatpush.msra.mxu0 0.0
    %358 = vmatpush.msra.mxu0 0.0
    %359 = vmatpush.msra.mxu0 0.0
    %360 = vmatpush.msra.mxu0 0.0
    %361 = vmatpush.msra.mxu0 0.0
    %362 = vmatpush.msra.mxu0 0.0
    %363 = vmatpush.msra.mxu0 0.0
    %364 = vmatpush.msra.mxu0 0.0
    %365 = vmatpush.msra.mxu0 0.0
    %366 = vmatpush.msra.mxu0 0.0
    %367 = vmatpush.msra.mxu0 0.0
    %368 = vmatpush.msra.mxu0 %v112
    %369 = vmatpush.msra.mxu0 %v88
    %370 = vmatpush.msra.mxu0 %v87
    %371 = vmatpush.msra.mxu0 %v86
    %372 = vmatmul.f32.gmra.mxu0 %v351
    %v373 = vpop.f32.mrf.mxu0
    %v374 = vadd.f32 0.0, %v373
    %375 = vmatmul.f32.gmra.mxu0 %v354
    %v376 = vpop.f32.mrf.mxu0
    %v377 = vadd.f32 0.0, %v376
    %378 = vdwg.mxu0
    %v379 = vmul.f32 %v268, %v219
    %v380 = vmul.f32 %v271, %v219
    %v381 = vmul.f32 %v321, %v222
    %v382 = vmul.f32 %v324, %v222
    %v383 = vadd.f32 %v379, %v381
    %v384 = vadd.f32 %v380, %v382
    %v385 = vmul.f32 %v374, %v227
    %v386 = vmul.f32 %v377, %v227
    %v387 = vadd.f32 %v383, %v385
    %v388 = vadd.f32 %v384, %v386
    %v389 = vmax.f32 %v336, %v387
    %v390 = vmax.f32 %v337, %v388
    %391 = vset.pattern.permute.xlu0 6
    %392 = vperm.xlu0 %391, %v84
    %v393 = vpop.permute.xlu0 %392
    %394 = vset.pattern.permute.xlu0 6
    %395 = vperm.xlu0 %394, %v85
    %v396 = vpop.permute.xlu0 %395
    %vm397 = vcmp.eq.s32.totalorder %v393, %v27
    %vm398 = vcmp.eq.s32.totalorder %v396, %v27
    %v399 = vsel %vm397, 1, 0
    %v400 = vsel %vm398, 1, 0
    %v401 = vcvt.s32.f32 %v399
    %v402 = vcvt.s32.f32 %v400
    %v404 = vsel %vm103, %v401, 0
    %v407 = vsel %vm103, %v402, 0
    %409 = vmatpush.msra.mxu0 0.0
    %410 = vmatpush.msra.mxu0 0.0
    %411 = vmatpush.msra.mxu0 0.0
    %412 = vmatpush.msra.mxu0 0.0
    %413 = vmatpush.msra.mxu0 0.0
    %414 = vmatpush.msra.mxu0 0.0
    %415 = vmatpush.msra.mxu0 0.0
    %416 = vmatpush.msra.mxu0 0.0
    %417 = vmatpush.msra.mxu0 0.0
    %418 = vmatpush.msra.mxu0 0.0
    %419 = vmatpush.msra.mxu0 0.0
    %420 = vmatpush.msra.mxu0 0.0
    %421 = vmatpush.msra.mxu0 %v112
    %422 = vmatpush.msra.mxu0 %v88
    %423 = vmatpush.msra.mxu0 %v87
    %424 = vmatpush.msra.mxu0 %v86
    %425 = vmatmul.f32.gmra.mxu0 %v404
    %v426 = vpop.f32.mrf.mxu0
    %v427 = vadd.f32 0.0, %v426
    %428 = vmatmul.f32.gmra.mxu0 %v407
    %v429 = vpop.f32.mrf.mxu0
    %v430 = vadd.f32 0.0, %v429
    %431 = vdwg.mxu0
    %v432 = vmul.f32 %v321, %v219
    %v433 = vmul.f32 %v324, %v219
    %v434 = vmul.f32 %v374, %v222
    %v435 = vmul.f32 %v377, %v222
    %v436 = vadd.f32 %v432, %v434
    %v437 = vadd.f32 %v433, %v435
    %v438 = vmul.f32 %v427, %v227
    %v439 = vmul.f32 %v430, %v227
    %v440 = vadd.f32 %v436, %v438
    %v441 = vadd.f32 %v437, %v439
    %v442 = vmax.f32 %v389, %v440
    %v443 = vmax.f32 %v390, %v441
    %444 = vset.pattern.permute.xlu0 7
    %445 = vperm.xlu0 %444, %v84
    %v446 = vpop.permute.xlu0 %445
    %447 = vset.pattern.permute.xlu0 7
    %448 = vperm.xlu0 %447, %v85
    %v449 = vpop.permute.xlu0 %448
    %vm450 = vcmp.eq.s32.totalorder %v446, %v27
    %vm451 = vcmp.eq.s32.totalorder %v449, %v27
    %v452 = vsel %vm450, 1, 0
    %v453 = vsel %vm451, 1, 0
    %v454 = vcvt.s32.f32 %v452
    %v455 = vcvt.s32.f32 %v453
    %v457 = vsel %vm103, %v454, 0
    %v460 = vsel %vm103, %v455, 0
    %462 = vmatpush.msra.mxu0 0.0
    %463 = vmatpush.msra.mxu0 0.0
    %464 = vmatpush.msra.mxu0 0.0
    %465 = vmatpush.msra.mxu0 0.0
    %466 = vmatpush.msra.mxu0 0.0
    %467 = vmatpush.msra.mxu0 0.0
    %468 = vmatpush.msra.mxu0 0.0
    %469 = vmatpush.msra.mxu0 0.0
    %470 = vmatpush.msra.mxu0 0.0
    %471 = vmatpush.msra.mxu0 0.0
    %472 = vmatpush.msra.mxu0 0.0
    %473 = vmatpush.msra.mxu0 0.0
    %474 = vmatpush.msra.mxu0 %v112
    %475 = vmatpush.msra.mxu0 %v88
    %476 = vmatpush.msra.mxu0 %v87
    %477 = vmatpush.msra.mxu0 %v86
    %478 = vmatmul.f32.gmra.mxu0 %v457
    %v479 = vpop.f32.mrf.mxu0
    %v480 = vadd.f32 0.0, %v479
    %481 = vmatmul.f32.gmra.mxu0 %v460
    %v482 = vpop.f32.mrf.mxu0
    %v483 = vadd.f32 0.0, %v482
    %484 = vdwg.mxu0
    %v485 = vmul.f32 %v374, %v219
    %v486 = vmul.f32 %v377, %v219
    %v487 = vmul.f32 %v427, %v222
    %v488 = vmul.f32 %v430, %v222
    %v489 = vadd.f32 %v485, %v487
    %v490 = vadd.f32 %v486, %v488
    %v491 = vmul.f32 %v480, %v227
    %v492 = vmul.f32 %v483, %v227
    %v493 = vadd.f32 %v489, %v491
    %v494 = vadd.f32 %v490, %v492
    %v495 = vmax.f32 %v442, %v493
    %v496 = vmax.f32 %v443, %v494
    %497 = vset.pattern.permute.xlu0 8
    %498 = vperm.xlu0 %497, %v84
    %v499 = vpop.permute.xlu0 %498
    %500 = vset.pattern.permute.xlu0 8
    %501 = vperm.xlu0 %500, %v85
    %v502 = vpop.permute.xlu0 %501
    %vm503 = vcmp.eq.s32.totalorder %v499, %v27
    %vm504 = vcmp.eq.s32.totalorder %v502, %v27
    %v505 = vsel %vm503, 1, 0
    %v506 = vsel %vm504, 1, 0
    %v507 = vcvt.s32.f32 %v505
    %v508 = vcvt.s32.f32 %v506
    %v510 = vsel %vm103, %v507, 0
    %v513 = vsel %vm103, %v508, 0
    %515 = vmatpush.msra.mxu0 0.0
    %516 = vmatpush.msra.mxu0 0.0
    %517 = vmatpush.msra.mxu0 0.0
    %518 = vmatpush.msra.mxu0 0.0
    %519 = vmatpush.msra.mxu0 0.0
    %520 = vmatpush.msra.mxu0 0.0
    %521 = vmatpush.msra.mxu0 0.0
    %522 = vmatpush.msra.mxu0 0.0
    %523 = vmatpush.msra.mxu0 0.0
    %524 = vmatpush.msra.mxu0 0.0
    %525 = vmatpush.msra.mxu0 0.0
    %526 = vmatpush.msra.mxu0 0.0
    %527 = vmatpush.msra.mxu0 %v112
    %528 = vmatpush.msra.mxu0 %v88
    %529 = vmatpush.msra.mxu0 %v87
    %530 = vmatpush.msra.mxu0 %v86
    %531 = vmatmul.f32.gmra.mxu0 %v510
    %v532 = vpop.f32.mrf.mxu0
    %v533 = vadd.f32 0.0, %v532
    %534 = vmatmul.f32.gmra.mxu0 %v513
    %v535 = vpop.f32.mrf.mxu0
    %v536 = vadd.f32 0.0, %v535
    %537 = vdwg.mxu0
    %v538 = vmul.f32 %v427, %v219
    %v539 = vmul.f32 %v430, %v219
    %v540 = vmul.f32 %v480, %v222
    %v541 = vmul.f32 %v483, %v222
    %v542 = vadd.f32 %v538, %v540
    %v543 = vadd.f32 %v539, %v541
    %v544 = vmul.f32 %v533, %v227
    %v545 = vmul.f32 %v536, %v227
    %v546 = vadd.f32 %v542, %v544
    %v547 = vadd.f32 %v543, %v545
    %v548 = vmax.f32 %v495, %v546
    %v549 = vmax.f32 %v496, %v547
    %550 = vset.pattern.permute.xlu0 9
    %551 = vperm.xlu0 %550, %v84
    %v552 = vpop.permute.xlu0 %551
    %553 = vset.pattern.permute.xlu0 9
    %554 = vperm.xlu0 %553, %v85
    %v555 = vpop.permute.xlu0 %554
    %vm556 = vcmp.eq.s32.totalorder %v552, %v27
    %vm557 = vcmp.eq.s32.totalorder %v555, %v27
    %v558 = vsel %vm556, 1, 0
    %v559 = vsel %vm557, 1, 0
    %v560 = vcvt.s32.f32 %v558
    %v561 = vcvt.s32.f32 %v559
    %v563 = vsel %vm103, %v560, 0
    %v566 = vsel %vm103, %v561, 0
    %568 = vmatpush.msra.mxu0 0.0
    %569 = vmatpush.msra.mxu0 0.0
    %570 = vmatpush.msra.mxu0 0.0
    %571 = vmatpush.msra.mxu0 0.0
    %572 = vmatpush.msra.mxu0 0.0
    %573 = vmatpush.msra.mxu0 0.0
    %574 = vmatpush.msra.mxu0 0.0
    %575 = vmatpush.msra.mxu0 0.0
    %576 = vmatpush.msra.mxu0 0.0
    %577 = vmatpush.msra.mxu0 0.0
    %578 = vmatpush.msra.mxu0 0.0
    %579 = vmatpush.msra.mxu0 0.0
    %580 = vmatpush.msra.mxu0 %v112
    %581 = vmatpush.msra.mxu0 %v88
    %582 = vmatpush.msra.mxu0 %v87
    %583 = vmatpush.msra.mxu0 %v86
    %584 = vmatmul.f32.gmra.mxu0 %v563
    %v585 = vpop.f32.mrf.mxu0
    %v586 = vadd.f32 0.0, %v585
    %587 = vmatmul.f32.gmra.mxu0 %v566
    %v588 = vpop.f32.mrf.mxu0
    %v589 = vadd.f32 0.0, %v588
    %590 = vdwg.mxu0
    %v591 = vmul.f32 %v480, %v219
    %v592 = vmul.f32 %v483, %v219
    %v593 = vmul.f32 %v533, %v222
    %v594 = vmul.f32 %v536, %v222
    %v595 = vadd.f32 %v591, %v593
    %v596 = vadd.f32 %v592, %v594
    %v597 = vmul.f32 %v586, %v227
    %v598 = vmul.f32 %v589, %v227
    %v599 = vadd.f32 %v595, %v597
    %v600 = vadd.f32 %v596, %v598
    %v601 = vmax.f32 %v548, %v599
    %v602 = vmax.f32 %v549, %v600
    %603 = vset.pattern.permute.xlu0 10
    %604 = vperm.xlu0 %603, %v84
    %v605 = vpop.permute.xlu0 %604
    %606 = vset.pattern.permute.xlu0 10
    %607 = vperm.xlu0 %606, %v85
    %v608 = vpop.permute.xlu0 %607
    %vm609 = vcmp.eq.s32.totalorder %v605, %v27
    %vm610 = vcmp.eq.s32.totalorder %v608, %v27
    %v611 = vsel %vm609, 1, 0
    %v612 = vsel %vm610, 1, 0
    %v613 = vcvt.s32.f32 %v611
    %v614 = vcvt.s32.f32 %v612
    %v616 = vsel %vm103, %v613, 0
    %v619 = vsel %vm103, %v614, 0
    %621 = vmatpush.msra.mxu0 0.0
    %622 = vmatpush.msra.mxu0 0.0
    %623 = vmatpush.msra.mxu0 0.0
    %624 = vmatpush.msra.mxu0 0.0
    %625 = vmatpush.msra.mxu0 0.0
    %626 = vmatpush.msra.mxu0 0.0
    %627 = vmatpush.msra.mxu0 0.0
    %628 = vmatpush.msra.mxu0 0.0
    %629 = vmatpush.msra.mxu0 0.0
    %630 = vmatpush.msra.mxu0 0.0
    %631 = vmatpush.msra.mxu0 0.0
    %632 = vmatpush.msra.mxu0 0.0
    %633 = vmatpush.msra.mxu0 %v112
    %634 = vmatpush.msra.mxu0 %v88
    %635 = vmatpush.msra.mxu0 %v87
    %636 = vmatpush.msra.mxu0 %v86
    %637 = vmatmul.f32.gmra.mxu0 %v616
    %v638 = vpop.f32.mrf.mxu0
    %v639 = vadd.f32 0.0, %v638
    %640 = vmatmul.f32.gmra.mxu0 %v619
    %v641 = vpop.f32.mrf.mxu0
    %v642 = vadd.f32 0.0, %v641
    %643 = vdwg.mxu0
    %v644 = vmul.f32 %v533, %v219
    %v645 = vmul.f32 %v536, %v219
    %v646 = vmul.f32 %v586, %v222
    %v647 = vmul.f32 %v589, %v222
    %v648 = vadd.f32 %v644, %v646
    %v649 = vadd.f32 %v645, %v647
    %v650 = vmul.f32 %v639, %v227
    %v651 = vmul.f32 %v642, %v227
    %v652 = vadd.f32 %v648, %v650
    %v653 = vadd.f32 %v649, %v651
    %v654 = vmax.f32 %v601, %v652
    %v655 = vmax.f32 %v602, %v653
    %656 = vset.pattern.permute.xlu0 11
    %657 = vperm.xlu0 %656, %v84
    %v658 = vpop.permute.xlu0 %657
    %659 = vset.pattern.permute.xlu0 11
    %660 = vperm.xlu0 %659, %v85
    %v661 = vpop.permute.xlu0 %660
    %vm662 = vcmp.eq.s32.totalorder %v658, %v27
    %vm663 = vcmp.eq.s32.totalorder %v661, %v27
    %v664 = vsel %vm662, 1, 0
    %v665 = vsel %vm663, 1, 0
    %v666 = vcvt.s32.f32 %v664
    %v667 = vcvt.s32.f32 %v665
    %v669 = vsel %vm103, %v666, 0
    %v672 = vsel %vm103, %v667, 0
    %674 = vmatpush.msra.mxu0 0.0
    %675 = vmatpush.msra.mxu0 0.0
    %676 = vmatpush.msra.mxu0 0.0
    %677 = vmatpush.msra.mxu0 0.0
    %678 = vmatpush.msra.mxu0 0.0
    %679 = vmatpush.msra.mxu0 0.0
    %680 = vmatpush.msra.mxu0 0.0
    %681 = vmatpush.msra.mxu0 0.0
    %682 = vmatpush.msra.mxu0 0.0
    %683 = vmatpush.msra.mxu0 0.0
    %684 = vmatpush.msra.mxu0 0.0
    %685 = vmatpush.msra.mxu0 0.0
    %686 = vmatpush.msra.mxu0 %v112
    %687 = vmatpush.msra.mxu0 %v88
    %688 = vmatpush.msra.mxu0 %v87
    %689 = vmatpush.msra.mxu0 %v86
    %690 = vmatmul.f32.gmra.mxu0 %v669
    %v691 = vpop.f32.mrf.mxu0
    %v692 = vadd.f32 0.0, %v691
    %693 = vmatmul.f32.gmra.mxu0 %v672
    %v694 = vpop.f32.mrf.mxu0
    %v695 = vadd.f32 0.0, %v694
    %696 = vdwg.mxu0
    %v697 = vmul.f32 %v586, %v219
    %v698 = vmul.f32 %v589, %v219
    %v699 = vmul.f32 %v639, %v222
    %v700 = vmul.f32 %v642, %v222
    %v701 = vadd.f32 %v697, %v699
    %v702 = vadd.f32 %v698, %v700
    %v703 = vmul.f32 %v692, %v227
    %v704 = vmul.f32 %v695, %v227
    %v705 = vadd.f32 %v701, %v703
    %v706 = vadd.f32 %v702, %v704
    %v707 = vmax.f32 %v654, %v705
    %v708 = vmax.f32 %v655, %v706
    %v709 = vld [vmem:[%s5] sm:$0x1]
    %v711 = vperm.slane %v709, 0
    %v713 = vadd.f32 %v707, %v711
    %v714 = vadd.f32 %v708, %v711
    %717 = vrot.lane.b32.xlu0 %v713, 32
    %v718 = vpop.permute.xlu0 %717
    %719 = vrot.lane.b32.xlu0 %v714, 32
    %v720 = vpop.permute.xlu0 %719
    %vm723 = vcmask 785664
    %724 = vst.msk [vmem:[#allocation2] sm:$0xff] %vm723, %v718
    %725 = vst.msk [vmem:[#allocation2 + $0x8] sm:$0xff] %vm723, %v720
    // Predicated region
    $region26: #{tpu_custom_call.1} parent=1 // pred_check
      _
    $region27: #{tpu_custom_call.1} parent=1 // pred_check_branch
      %727 = sbr.rel (0) target = $region29
    $region28: #{tpu_custom_call.1} parent=1 // pred_region
      %729 = vsyncadd [#allocation3], 0
      %s730 = sshll.u32 [#allocation2], 4
      %s731 = int_to_ptr.vmem [resolvable:$true] %s730
      %s732 = sshll.u32 %s6, 4
      %s733 = int_to_ptr.hbm [resolvable:$true] %s732
      %738 = dma.vmem_to_hbm [thread:$0]  %s731, 256, %s733, [#allocation3], 128, 128, 8
    $region29: #{tpu_custom_call.1} parent=1 // pred_fallthru
      _
    // Predicated region
    $region30: #{tpu_custom_call.1} parent=1 // pred_check
      _
    $region31: #{tpu_custom_call.1} parent=1 // pred_check_branch
      %740 = sbr.rel (0) target = $region33
    $region32: #{tpu_custom_call.1} parent=1 // pred_region
      %742 = dma.done [#allocation3], 256
    $region33: #{tpu_custom_call.1} parent=1 // pred_fallthru
      _
    %743 = vsyncpa [#allocation3], 1

</llo_original>
